<compile_context>
chip_gen: v5e
topology: v5e:2x2
jax: 0.10.0
libtpu: 0.0.40
codegen_flags: <defaults>
</compile_context>

<pallas_src>
import jax
import jax.numpy as jnp
from jax.experimental import pallas as pl
from jax.experimental.pallas import tpu as pltpu


def _add_kernel(x_ref, pos_ref, o_ref):
    # One lane-dense slab: out = x + pos (cast back in case dtypes differ).
    o_ref[...] = (x_ref[...] + pos_ref[...]).astype(o_ref.dtype)


def _device_kind():
    try:
        return jax.devices()[0].device_kind.lower()
    except Exception:
        return ""


def _largest_pow2_le(n):
    p = 1
    while p * 2 <= n:
        p *= 2
    return p


def positional_embedding(
    x,
    emb_table,
    *,
    max_lane=512,
    max_block_bytes=2 * 1024 * 1024,
    min_pallas_bytes=None,
    force_pallas=False,
):
    """out[s, :] = x[s, :] + emb_table[s, :]  for s in [0, seq_len)."""
    seq, dim = x.shape
    max_len, dim_e = emb_table.shape
    if dim != dim_e:
        raise ValueError("embedding dim mismatch")
    if seq > max_len:
        raise ValueError("sequence longer than max_len")

    total = seq * dim
    itemsize = x.dtype.itemsize
    nbytes = total * itemsize

    kind = _device_kind()
    two_cores = ("v7" in kind) or ("7x" in kind)  # v7x: 2 TensorCores / chip
    if min_pallas_bytes is None:
        # Launch + per-step overhead dwarfs HBM time for small adds; break-even
        # moves higher on v7x (3.2 TB/s HBM makes the mem-bound work cheaper).
        min_pallas_bytes = (4 if two_cores else 1) * 1024 * 1024

    def _xla_add():
        # Fused dynamic-slice + add; strictly faster than a kernel launch for
        # the module's nominal shapes (dim=32, seq<=3000 => <=384 KiB).
        return x + jax.lax.slice_in_dim(emb_table, 0, seq, axis=0)

    if not force_pallas and nbytes < min_pallas_bytes:
        return _xla_add()

    min_rows = {4: 8, 2: 16, 1: 32}.get(itemsize, 8)

    # Lane-dense view: largest multiple of 128 dividing BOTH seq*dim and
    # max_len*dim so both reshapes are free bitcasts (no pad / slice copies).
    table_total = max_len * dim
    lane = 0
    for cand in range(max_lane, 127, -128):
        if total % cand == 0 and table_total % cand == 0:
            lane = cand
            break

    if lane:
        rows = total // lane
        x2d = x.reshape(rows, lane)
        pos2d = emb_table.reshape(table_total // lane, lane)
        out_last = lane
    else:
        # Ragged fallback: tile the original (seq, dim) layout.  Block last dim
        # equals the full array dim, so any dim is legal (masked stores if <128).
        rows = seq
        x2d = x
        pos2d = emb_table
        out_last = dim

    if rows < min_rows:
        # Smaller than one native sublane tile; never worth a kernel.
        return _xla_add()

    # Largest power-of-two row tile with one block <= max_block_bytes
    # (3 streams x 2 buffers x block stays well under every VMEM budget),
    # never below the dtype's native tile, never larger than the array.
    cap = max(min_rows, max_block_bytes // (out_last * itemsize))
    tile_rows = max(min_rows, _largest_pow2_le(cap))
    while tile_rows > min_rows and tile_rows > rows:
        tile_rows //= 2
    if two_cores:
        # v7x: keep >= 4 parallel grid steps so each TensorCore still gets
        # prefetch/compute overlap.  Single-core parts (v5e/v6e) keep the
        # fewest, biggest blocks (extra steps are ~0.35 us of pure overhead).
        while tile_rows > min_rows and pl.cdiv(rows, tile_rows) < 4:
            tile_rows //= 2

    grid = (pl.cdiv(rows, tile_rows),)  # ragged last block: reads padded,
                                        # writes masked -- no jnp.pad needed.

    out2d = pl.pallas_call(
        _add_kernel,
        out_shape=jax.ShapeDtypeStruct((rows, out_last), x.dtype),
        grid=grid,
        in_specs=[
            pl.BlockSpec((tile_rows, out_last), lambda i: (i, 0)),  # x slab
            pl.BlockSpec((tile_rows, out_last), lambda i: (i, 0)),  # table prefix
        ],
        out_specs=pl.BlockSpec((tile_rows, out_last), lambda i: (i, 0)),
        # Mirror torch's in-place add (real saving only once x is donated).
        input_output_aliases={0: 0},
        cost_estimate=pl.CostEstimate(
            flops=total, transcendentals=0, bytes_accessed=3 * nbytes),
        compiler_params=pltpu.CompilerParams(
            dimension_semantics=("parallel",),
            # ~12 MiB resident at 2 MiB blocks; 32 MiB limit keeps headroom on
            # v5e/v6e and stays safely under v7x's 64 MiB physical VMEM.
            vmem_limit_bytes=32 * 1024 * 1024,
        ),
    )(x2d, pos2d)

    return out2d.reshape(seq, dim)


if __name__ == "__main__":
    # Module config (matches nn.Embedding(max_len, dim) shapes).
    dim = 32
    max_len = 3000

    key = jax.random.PRNGKey(0)
    k_emb, k1, k2, k3, k4 = jax.random.split(key, 5)

    # Deterministic synthetic parameters: nn.Embedding default init is N(0, 1).
    emb_table = jax.random.normal(k_emb, (max_len, dim), dtype=jnp.float32)

    def ref(xin):
        return xin + emb_table[: xin.shape[0]]

    # Case 1: nominal tiny shape (seq=8).  Dispatch routes this to the fused
    # XLA add (a kernel launch would be pure overhead at 1 KiB).
    x1 = jax.random.normal(k1, (8, dim), dtype=jnp.float32)
    r1 = ref(x1)
    o1 = jax.block_until_ready(positional_embedding(x1, emb_table))
    assert o1.shape == (8, dim) and o1.dtype == x1.dtype
    assert jnp.allclose(o1, r1, atol=1e-6, rtol=1e-6)

    # Case 2: larger sequence forced through the Pallas lane-dense path
    # (lane=256 slabs), under jit so the wrapper reshapes are free bitcasts.
    x2 = jax.random.normal(k2, (2048, dim), dtype=jnp.float32)
    r2 = ref(x2)
    fwd = jax.jit(lambda xa, tb: positional_embedding(xa, tb, force_pallas=True))
    o2 = jax.block_until_ready(fwd(x2, emb_table))
    assert o2.shape == (2048, dim) and o2.dtype == x2.dtype
    assert jnp.allclose(o2, r2, atol=1e-6, rtol=1e-6)

    # Case 3: ragged row count + small blocks -> multi-step grid with a
    # masked partial last block (exercises the no-pad ragged handling).
    x3 = jax.random.normal(k3, (1000, dim), dtype=jnp.float32)
    r3 = ref(x3)
    o3 = jax.block_until_ready(
        positional_embedding(x3, emb_table, force_pallas=True,
                             max_block_bytes=32 * 1024))
    assert o3.shape == (1000, dim) and o3.dtype == x3.dtype
    assert jnp.allclose(o3, r3, atol=1e-6, rtol=1e-6)

    # Case 4: no common 128-multiple lane exists -> (tile_rows, dim) fallback.
    x4 = jax.random.normal(k4, (999, dim), dtype=jnp.float32)
    r4 = ref(x4)
    o4 = jax.block_until_ready(
        positional_embedding(x4, emb_table, force_pallas=True,
                             max_block_bytes=32 * 1024))
    assert o4.shape == (999, dim) and o4.dtype == x4.dtype
    assert jnp.allclose(o4, r4, atol=1e-6, rtol=1e-6)

    print("KERNEL_OK")
</pallas_src>

<mosaic_0001>
module attributes {stable_mosaic.version = 11 : i64} {
  func.func @_add_kernel(%arg0: i32, %arg1: memref<256x256xf32, #tpu.memory_space<vmem>>, %arg2: memref<256x256xf32, #tpu.memory_space<vmem>>, %arg3: memref<256x256xf32, #tpu.memory_space<vmem>>) attributes {dimension_semantics = [#tpu.dimension_semantics<parallel>], iteration_bounds = array<i64: 1>, scalar_prefetch = 0 : i64, scratch_operands = 0 : i64, tpu.core_type = #tpu.core_type<tc>, window_params = [{transform_indices = @transform_0, window_bounds = array<i64: 256, 256>}, {transform_indices = @transform_1, window_bounds = array<i64: 256, 256>}, {transform_indices = @transform_2, window_bounds = array<i64: 256, 256>}]} {
    %c0 = arith.constant 0 : index
    %c0_0 = arith.constant 0 : index
    %0 = vector.load %arg1[%c0, %c0_0] : memref<256x256xf32, #tpu.memory_space<vmem>>, vector<256x256xf32>
    %c0_1 = arith.constant 0 : index
    %c0_2 = arith.constant 0 : index
    %1 = vector.load %arg2[%c0_1, %c0_2] : memref<256x256xf32, #tpu.memory_space<vmem>>, vector<256x256xf32>
    %2 = arith.addf %0, %1 : vector<256x256xf32>
    %c0_3 = arith.constant 0 : index
    %c0_4 = arith.constant 0 : index
    %3 = vector.load %arg3[%c0_3, %c0_4] : memref<256x256xf32, #tpu.memory_space<vmem>>, vector<256x256xf32>
    tpu.vector_store %arg3[%c0_3, %c0_4], %2 {strides = array<i32>} : memref<256x256xf32, #tpu.memory_space<vmem>>, vector<256x256xf32>,
    return
  }
  func.func @transform_0(%arg0: i32) -> (i32, i32) {
    %c0_i32 = arith.constant 0 : i32
    %c0_i32_0 = arith.constant 0 : i32
    return %arg0, %c0_i32 : i32, i32
  }
  func.func @transform_1(%arg0: i32) -> (i32, i32) {
    %c0_i32 = arith.constant 0 : i32
    %c0_i32_0 = arith.constant 0 : i32
    return %arg0, %c0_i32 : i32, i32
  }
  func.func @transform_2(%arg0: i32) -> (i32, i32) {
    %c0_i32 = arith.constant 0 : i32
    %c0_i32_0 = arith.constant 0 : i32
    return %arg0, %c0_i32 : i32, i32
  }
}

</mosaic_0001>

<llo_original>
// kernel: _lambda_.1
$region0: #{_lambda_.1}
  #allocation0 [shape = 'u32[]', space=smem, size = 0x4, offset = 0x4, fixed_abs, tag = 'smem constant byte address 0x4 - core index']
  #allocation1 [shape = 'u32[72,128]{1,0:T(1,128)}', space=vmem, size = 0x9000, scoped, tag = 'internal scratch']
  %s0 = inlined_call_operand.vmem [shape: f32[256,256], index: 0, kind: input, shape index: {}, may-alias: {0,2}]
  %s1 = inlined_call_operand.vmem [shape: f32[375,256], index: 1, kind: input, shape index: {}]
  %s2 = inlined_call_operand.vmem [shape: f32[256,256], index: 2, kind: output, shape index: {}, may-alias: {0,2}]
  %s3 = sld [smem:[#allocation0]]
  $region18: #{_lambda_.1} parent=0
    _
  %s5 = ssub.s32 1, %s3
  %s6 = scalar_select 0, %s5, %s3
  // Predicated region
  $region2: #{_lambda_.1} parent=0 // pred_check
    _
  $region3: #{_lambda_.1} parent=0 // pred_check_branch
    %8 = sbr.rel (0) target = $region5
  $region4: #{_lambda_.1} parent=0 // pred_region
    _
  $region5: #{_lambda_.1} parent=0 // pred_fallthru
    _
  // Predicated region
  $region6: #{_lambda_.1} parent=0 // pred_check
    _
  $region7: #{_lambda_.1} parent=0 // pred_check_branch
    %10 = sbr.rel (0) target = $region9
  $region8: #{_lambda_.1} parent=0 // pred_region
    _
  $region9: #{_lambda_.1} parent=0 // pred_fallthru
    _
  %v11 = vld [vmem:[%s0] sm:$0xff]
  %v12 = vld [vmem:[%s0 + $0x8] sm:$0xff]
  %v13 = vld [vmem:[%s0 + $0x10] sm:$0xff]
  %v14 = vld [vmem:[%s0 + $0x18] sm:$0xff]
  %v15 = vld [vmem:[%s0 + $0x20] sm:$0xff]
  %v16 = vld [vmem:[%s0 + $0x28] sm:$0xff]
  %v17 = vld [vmem:[%s0 + $0x30] sm:$0xff]
  %v18 = vld [vmem:[%s0 + $0x38] sm:$0xff]
  %v19 = vld [vmem:[%s0 + $0x40] sm:$0xff]
  %v20 = vld [vmem:[%s0 + $0x48] sm:$0xff]
  %v21 = vld [vmem:[%s0 + $0x50] sm:$0xff]
  %v22 = vld [vmem:[%s0 + $0x58] sm:$0xff]
  %v23 = vld [vmem:[%s0 + $0x60] sm:$0xff]
  %v24 = vld [vmem:[%s0 + $0x68] sm:$0xff]
  %v25 = vld [vmem:[%s0 + $0x70] sm:$0xff]
  %v26 = vld [vmem:[%s0 + $0x78] sm:$0xff]
  %v27 = vld [vmem:[%s0 + $0x80] sm:$0xff]
  %v28 = vld [vmem:[%s0 + $0x88] sm:$0xff]
  %v29 = vld [vmem:[%s0 + $0x90] sm:$0xff]
  %v30 = vld [vmem:[%s0 + $0x98] sm:$0xff]
  %v31 = vld [vmem:[%s0 + $0xa0] sm:$0xff]
  %v32 = vld [vmem:[%s0 + $0xa8] sm:$0xff]
  %v33 = vld [vmem:[%s0 + $0xb0] sm:$0xff]
  %v34 = vld [vmem:[%s0 + $0xb8] sm:$0xff]
  %v35 = vld [vmem:[%s0 + $0xc0] sm:$0xff]
  %v36 = vld [vmem:[%s0 + $0xc8] sm:$0xff]
  %v37 = vld [vmem:[%s0 + $0xd0] sm:$0xff]
  %v38 = vld [vmem:[%s0 + $0xd8] sm:$0xff]
  %v39 = vld [vmem:[%s0 + $0xe0] sm:$0xff]
  %v40 = vld [vmem:[%s0 + $0xe8] sm:$0xff]
  %v41 = vld [vmem:[%s0 + $0xf0] sm:$0xff]
  %v42 = vld [vmem:[%s0 + $0xf8] sm:$0xff]
  %v43 = vld [vmem:[%s0 + $0x100] sm:$0xff]
  %v44 = vld [vmem:[%s0 + $0x108] sm:$0xff]
  %v45 = vld [vmem:[%s0 + $0x110] sm:$0xff]
  %v46 = vld [vmem:[%s0 + $0x118] sm:$0xff]
  %v47 = vld [vmem:[%s0 + $0x120] sm:$0xff]
  %v48 = vld [vmem:[%s0 + $0x128] sm:$0xff]
  %v49 = vld [vmem:[%s0 + $0x130] sm:$0xff]
  %v50 = vld [vmem:[%s0 + $0x138] sm:$0xff]
  %v51 = vld [vmem:[%s0 + $0x140] sm:$0xff]
  %v52 = vld [vmem:[%s0 + $0x148] sm:$0xff]
  %v53 = vld [vmem:[%s0 + $0x150] sm:$0xff]
  %v54 = vld [vmem:[%s0 + $0x158] sm:$0xff]
  %v55 = vld [vmem:[%s0 + $0x160] sm:$0xff]
  %v56 = vld [vmem:[%s0 + $0x168] sm:$0xff]
  %v57 = vld [vmem:[%s0 + $0x170] sm:$0xff]
  %v58 = vld [vmem:[%s0 + $0x178] sm:$0xff]
  %v59 = vld [vmem:[%s0 + $0x180] sm:$0xff]
  %v60 = vld [vmem:[%s0 + $0x188] sm:$0xff]
  %v61 = vld [vmem:[%s0 + $0x190] sm:$0xff]
  %v62 = vld [vmem:[%s0 + $0x198] sm:$0xff]
  %v63 = vld [vmem:[%s0 + $0x1a0] sm:$0xff]
  %v64 = vld [vmem:[%s0 + $0x1a8] sm:$0xff]
  %v65 = vld [vmem:[%s0 + $0x1b0] sm:$0xff]
  %v66 = vld [vmem:[%s0 + $0x1b8] sm:$0xff]
  %v67 = vld [vmem:[%s0 + $0x1c0] sm:$0xff]
  %v68 = vld [vmem:[%s0 + $0x1c8] sm:$0xff]
  %v69 = vld [vmem:[%s0 + $0x1d0] sm:$0xff]
  %v70 = vld [vmem:[%s0 + $0x1d8] sm:$0xff]
  %v71 = vld [vmem:[%s0 + $0x1e0] sm:$0xff]
  %v72 = vld [vmem:[%s0 + $0x1e8] sm:$0xff]
  %v73 = vld [vmem:[%s0 + $0x1f0] sm:$0xff]
  %v74 = vld [vmem:[%s0 + $0x1f8] sm:$0xff]
  %v75 = vld [vmem:[%s1] sm:$0xff]
  %v76 = vld [vmem:[%s1 + $0x8] sm:$0xff]
  %v77 = vld [vmem:[%s1 + $0x10] sm:$0xff]
  %v78 = vld [vmem:[%s1 + $0x18] sm:$0xff]
  %v79 = vld [vmem:[%s1 + $0x20] sm:$0xff]
  %v80 = vld [vmem:[%s1 + $0x28] sm:$0xff]
  %v81 = vld [vmem:[%s1 + $0x30] sm:$0xff]
  %v82 = vld [vmem:[%s1 + $0x38] sm:$0xff]
  %v83 = vld [vmem:[%s1 + $0x40] sm:$0xff]
  %v84 = vld [vmem:[%s1 + $0x48] sm:$0xff]
  %v85 = vld [vmem:[%s1 + $0x50] sm:$0xff]
  %v86 = vld [vmem:[%s1 + $0x58] sm:$0xff]
  %v87 = vld [vmem:[%s1 + $0x60] sm:$0xff]
  %v88 = vld [vmem:[%s1 + $0x68] sm:$0xff]
  %v89 = vld [vmem:[%s1 + $0x70] sm:$0xff]
  %v90 = vld [vmem:[%s1 + $0x78] sm:$0xff]
  %v91 = vld [vmem:[%s1 + $0x80] sm:$0xff]
  %v92 = vld [vmem:[%s1 + $0x88] sm:$0xff]
  %v93 = vld [vmem:[%s1 + $0x90] sm:$0xff]
  %v94 = vld [vmem:[%s1 + $0x98] sm:$0xff]
  %v95 = vld [vmem:[%s1 + $0xa0] sm:$0xff]
  %v96 = vld [vmem:[%s1 + $0xa8] sm:$0xff]
  %v97 = vld [vmem:[%s1 + $0xb0] sm:$0xff]
  %v98 = vld [vmem:[%s1 + $0xb8] sm:$0xff]
  %v99 = vld [vmem:[%s1 + $0xc0] sm:$0xff]
  %v100 = vld [vmem:[%s1 + $0xc8] sm:$0xff]
  %v101 = vld [vmem:[%s1 + $0xd0] sm:$0xff]
  %v102 = vld [vmem:[%s1 + $0xd8] sm:$0xff]
  %v103 = vld [vmem:[%s1 + $0xe0] sm:$0xff]
  %v104 = vld [vmem:[%s1 + $0xe8] sm:$0xff]
  %v105 = vld [vmem:[%s1 + $0xf0] sm:$0xff]
  %v106 = vld [vmem:[%s1 + $0xf8] sm:$0xff]
  %v107 = vld [vmem:[%s1 + $0x100] sm:$0xff]
  %v108 = vld [vmem:[%s1 + $0x108] sm:$0xff]
  %v109 = vld [vmem:[%s1 + $0x110] sm:$0xff]
  %v110 = vld [vmem:[%s1 + $0x118] sm:$0xff]
  %v111 = vld [vmem:[%s1 + $0x120] sm:$0xff]
  %v112 = vld [vmem:[%s1 + $0x128] sm:$0xff]
  %v113 = vld [vmem:[%s1 + $0x130] sm:$0xff]
  %v114 = vld [vmem:[%s1 + $0x138] sm:$0xff]
  %v115 = vld [vmem:[%s1 + $0x140] sm:$0xff]
  %v116 = vld [vmem:[%s1 + $0x148] sm:$0xff]
  %v117 = vld [vmem:[%s1 + $0x150] sm:$0xff]
  %v118 = vld [vmem:[%s1 + $0x158] sm:$0xff]
  %v119 = vld [vmem:[%s1 + $0x160] sm:$0xff]
  %v120 = vld [vmem:[%s1 + $0x168] sm:$0xff]
  %v121 = vld [vmem:[%s1 + $0x170] sm:$0xff]
  %v122 = vld [vmem:[%s1 + $0x178] sm:$0xff]
  %v123 = vld [vmem:[%s1 + $0x180] sm:$0xff]
  %v124 = vld [vmem:[%s1 + $0x188] sm:$0xff]
  %v125 = vld [vmem:[%s1 + $0x190] sm:$0xff]
  %v126 = vld [vmem:[%s1 + $0x198] sm:$0xff]
  %v127 = vld [vmem:[%s1 + $0x1a0] sm:$0xff]
  %v128 = vld [vmem:[%s1 + $0x1a8] sm:$0xff]
  %v129 = vld [vmem:[%s1 + $0x1b0] sm:$0xff]
  %v130 = vld [vmem:[%s1 + $0x1b8] sm:$0xff]
  %v131 = vld [vmem:[%s1 + $0x1c0] sm:$0xff]
  %v132 = vld [vmem:[%s1 + $0x1c8] sm:$0xff]
  %v133 = vld [vmem:[%s1 + $0x1d0] sm:$0xff]
  %v134 = vld [vmem:[%s1 + $0x1d8] sm:$0xff]
  %v135 = vld [vmem:[%s1 + $0x1e0] sm:$0xff]
  %v136 = vld [vmem:[%s1 + $0x1e8] sm:$0xff]
  %v137 = vld [vmem:[%s1 + $0x1f0] sm:$0xff]
  %v138 = vld [vmem:[%s1 + $0x1f8] sm:$0xff]
  %v139 = vadd.f32 %v11, %v75
  %v140 = vadd.f32 %v12, %v76
  %v141 = vadd.f32 %v13, %v77
  %v142 = vadd.f32 %v14, %v78
  %v143 = vadd.f32 %v15, %v79
  %v144 = vadd.f32 %v16, %v80
  %v145 = vadd.f32 %v17, %v81
  %v146 = vadd.f32 %v18, %v82
  %v147 = vadd.f32 %v19, %v83
  %v148 = vadd.f32 %v20, %v84
  %v149 = vadd.f32 %v21, %v85
  %v150 = vadd.f32 %v22, %v86
  %v151 = vadd.f32 %v23, %v87
  %v152 = vadd.f32 %v24, %v88
  %v153 = vadd.f32 %v25, %v89
  %v154 = vadd.f32 %v26, %v90
  %v155 = vadd.f32 %v27, %v91
  %v156 = vadd.f32 %v28, %v92
  %v157 = vadd.f32 %v29, %v93
  %v158 = vadd.f32 %v30, %v94
  %v159 = vadd.f32 %v31, %v95
  %v160 = vadd.f32 %v32, %v96
  %v161 = vadd.f32 %v33, %v97
  %v162 = vadd.f32 %v34, %v98
  %v163 = vadd.f32 %v35, %v99
  %v164 = vadd.f32 %v36, %v100
  %v165 = vadd.f32 %v37, %v101
  %v166 = vadd.f32 %v38, %v102
  %v167 = vadd.f32 %v39, %v103
  %v168 = vadd.f32 %v40, %v104
  %v169 = vadd.f32 %v41, %v105
  %v170 = vadd.f32 %v42, %v106
  %v171 = vadd.f32 %v43, %v107
  %v172 = vadd.f32 %v44, %v108
  %v173 = vadd.f32 %v45, %v109
  %v174 = vadd.f32 %v46, %v110
  %v175 = vadd.f32 %v47, %v111
  %v176 = vadd.f32 %v48, %v112
  %v177 = vadd.f32 %v49, %v113
  %v178 = vadd.f32 %v50, %v114
  %v179 = vadd.f32 %v51, %v115
  %v180 = vadd.f32 %v52, %v116
  %v181 = vadd.f32 %v53, %v117
  %v182 = vadd.f32 %v54, %v118
  %v183 = vadd.f32 %v55, %v119
  %v184 = vadd.f32 %v56, %v120
  %v185 = vadd.f32 %v57, %v121
  %v186 = vadd.f32 %v58, %v122
  %v187 = vadd.f32 %v59, %v123
  %v188 = vadd.f32 %v60, %v124
  %v189 = vadd.f32 %v61, %v125
  %v190 = vadd.f32 %v62, %v126
  %v191 = vadd.f32 %v63, %v127
  %v192 = vadd.f32 %v64, %v128
  %v193 = vadd.f32 %v65, %v129
  %v194 = vadd.f32 %v66, %v130
  %v195 = vadd.f32 %v67, %v131
  %v196 = vadd.f32 %v68, %v132
  %v197 = vadd.f32 %v69, %v133
  %v198 = vadd.f32 %v70, %v134
  %v199 = vadd.f32 %v71, %v135
  %v200 = vadd.f32 %v72, %v136
  %v201 = vadd.f32 %v73, %v137
  %v202 = vadd.f32 %v74, %v138
  %203 = vst [vmem:[%s2] sm:$0xff] %v139
  %204 = vst [vmem:[%s2 + $0x8] sm:$0xff] %v140
  %205 = vst [vmem:[%s2 + $0x10] sm:$0xff] %v141
  %206 = vst [vmem:[%s2 + $0x18] sm:$0xff] %v142
  %207 = vst [vmem:[%s2 + $0x20] sm:$0xff] %v143
  %208 = vst [vmem:[%s2 + $0x28] sm:$0xff] %v144
  %209 = vst [vmem:[%s2 + $0x30] sm:$0xff] %v145
  %210 = vst [vmem:[%s2 + $0x38] sm:$0xff] %v146
  %211 = vst [vmem:[%s2 + $0x40] sm:$0xff] %v147
  %212 = vst [vmem:[%s2 + $0x48] sm:$0xff] %v148
  %213 = vst [vmem:[%s2 + $0x50] sm:$0xff] %v149
  %214 = vst [vmem:[%s2 + $0x58] sm:$0xff] %v150
  %215 = vst [vmem:[%s2 + $0x60] sm:$0xff] %v151
  %216 = vst [vmem:[%s2 + $0x68] sm:$0xff] %v152
  %217 = vst [vmem:[%s2 + $0x70] sm:$0xff] %v153
  %218 = vst [vmem:[%s2 + $0x78] sm:$0xff] %v154
  %219 = vst [vmem:[%s2 + $0x80] sm:$0xff] %v155
  %220 = vst [vmem:[%s2 + $0x88] sm:$0xff] %v156
  %221 = vst [vmem:[%s2 + $0x90] sm:$0xff] %v157
  %222 = vst [vmem:[%s2 + $0x98] sm:$0xff] %v158
  %223 = vst [vmem:[%s2 + $0xa0] sm:$0xff] %v159
  %224 = vst [vmem:[%s2 + $0xa8] sm:$0xff] %v160
  %225 = vst [vmem:[%s2 + $0xb0] sm:$0xff] %v161
  %226 = vst [vmem:[%s2 + $0xb8] sm:$0xff] %v162
  %227 = vst [vmem:[%s2 + $0xc0] sm:$0xff] %v163
  %228 = vst [vmem:[%s2 + $0xc8] sm:$0xff] %v164
  %229 = vst [vmem:[%s2 + $0xd0] sm:$0xff] %v165
  %230 = vst [vmem:[%s2 + $0xd8] sm:$0xff] %v166
  %231 = vst [vmem:[%s2 + $0xe0] sm:$0xff] %v167
  %232 = vst [vmem:[%s2 + $0xe8] sm:$0xff] %v168
  %233 = vst [vmem:[%s2 + $0xf0] sm:$0xff] %v169
  %234 = vst [vmem:[%s2 + $0xf8] sm:$0xff] %v170
  %235 = vst [vmem:[%s2 + $0x100] sm:$0xff] %v171
  %236 = vst [vmem:[%s2 + $0x108] sm:$0xff] %v172
  %237 = vst [vmem:[%s2 + $0x110] sm:$0xff] %v173
  %238 = vst [vmem:[%s2 + $0x118] sm:$0xff] %v174
  %239 = vst [vmem:[%s2 + $0x120] sm:$0xff] %v175
  %240 = vst [vmem:[%s2 + $0x128] sm:$0xff] %v176
  %241 = vst [vmem:[%s2 + $0x130] sm:$0xff] %v177
  %242 = vst [vmem:[%s2 + $0x138] sm:$0xff] %v178
  %243 = vst [vmem:[%s2 + $0x140] sm:$0xff] %v179
  %244 = vst [vmem:[%s2 + $0x148] sm:$0xff] %v180
  %245 = vst [vmem:[%s2 + $0x150] sm:$0xff] %v181
  %246 = vst [vmem:[%s2 + $0x158] sm:$0xff] %v182
  %247 = vst [vmem:[%s2 + $0x160] sm:$0xff] %v183
  %248 = vst [vmem:[%s2 + $0x168] sm:$0xff] %v184
  %249 = vst [vmem:[%s2 + $0x170] sm:$0xff] %v185
  %250 = vst [vmem:[%s2 + $0x178] sm:$0xff] %v186
  %251 = vst [vmem:[%s2 + $0x180] sm:$0xff] %v187
  %252 = vst [vmem:[%s2 + $0x188] sm:$0xff] %v188
  %253 = vst [vmem:[%s2 + $0x190] sm:$0xff] %v189
  %254 = vst [vmem:[%s2 + $0x198] sm:$0xff] %v190
  %255 = vst [vmem:[%s2 + $0x1a0] sm:$0xff] %v191
  %256 = vst [vmem:[%s2 + $0x1a8] sm:$0xff] %v192
  %257 = vst [vmem:[%s2 + $0x1b0] sm:$0xff] %v193
  %258 = vst [vmem:[%s2 + $0x1b8] sm:$0xff] %v194
  %259 = vst [vmem:[%s2 + $0x1c0] sm:$0xff] %v195
  %260 = vst [vmem:[%s2 + $0x1c8] sm:$0xff] %v196
  %261 = vst [vmem:[%s2 + $0x1d0] sm:$0xff] %v197
  %262 = vst [vmem:[%s2 + $0x1d8] sm:$0xff] %v198
  %263 = vst [vmem:[%s2 + $0x1e0] sm:$0xff] %v199
  %264 = vst [vmem:[%s2 + $0x1e8] sm:$0xff] %v200
  %265 = vst [vmem:[%s2 + $0x1f0] sm:$0xff] %v201
  %266 = vst [vmem:[%s2 + $0x1f8] sm:$0xff] %v202
  // Predicated region
  $region10: #{_lambda_.1} parent=0 // pred_check
    _
  $region11: #{_lambda_.1} parent=0 // pred_check_branch
    %268 = sbr.rel (0) target = $region13
  $region12: #{_lambda_.1} parent=0 // pred_region
    _
  $region13: #{_lambda_.1} parent=0 // pred_fallthru
    _
  // Predicated region
  $region14: #{_lambda_.1} parent=0 // pred_check
    _
  $region15: #{_lambda_.1} parent=0 // pred_check_branch
    %270 = sbr.rel (0) target = $region17
  $region16: #{_lambda_.1} parent=0 // pred_region
    _
  $region17: #{_lambda_.1} parent=0 // pred_fallthru
    _

</llo_original>
